<compile_context>
chip_gen: v6e
topology: v6e:2x2x1
jax: 0.10.0
libtpu: 0.0.40
codegen_flags: <defaults>
</compile_context>

<pallas_src>
import numpy as np
import jax
import jax.numpy as jnp
from jax.experimental import pallas as pl
from jax.experimental.pallas import tpu as pltpu

BN_EPS = 1e-5      # nn.BatchNorm1d default eps
COS_EPS = 1e-8     # nn.CosineSimilarity default eps
_LANE = 128

# Set to jnp.bfloat16 at production SimSiam sizes (embed_dim=2048, pred_dim=512):
# MXU is bf16-native on v5e/v6e/v7x, halves weight DMA + MXU cycles. Keep f32 here
# so the demo matches the f32 torch reference exactly.
MXU_DTYPE = jnp.float32


def _round_up(n, m):
    return ((n + m - 1) // m) * m


def _bn_train(z):
    """nn.BatchNorm1d training-mode normalization (biased batch variance)."""
    mu = jnp.mean(z, axis=0, keepdims=True)
    var = jnp.mean(jnp.square(z - mu), axis=0, keepdims=True)
    return (z - mu) * jax.lax.rsqrt(var + BN_EPS)


def _simsiam_fused_kernel(ids_ref, batch_ref, g1_ref, b1_ref, w1_ref,
                          g2_ref, b2_ref, w2_ref, bias2_ref, out_ref, xs_ref):
    """Single-shot kernel: gather positives, run predictor on [batch; positives],
    compute both cosine directions and the final SimSiam loss."""
    BS, Ep = batch_ref.shape
    Pp = w1_ref.shape[1]

    # --- in-kernel positive gather: xs = [batch ; batch[ids_pos]] in VMEM scratch ---
    xs_ref[pl.ds(0, BS), :] = batch_ref[...]
    # BS is small & static here; at production batch sizes switch to lax.fori_loop/pl.loop.
    for i in range(BS):
        xs_ref[pl.ds(BS + i, 1), :] = batch_ref[pl.ds(ids_ref[i], 1), :]

    x = xs_ref[...].astype(jnp.float32)                       # (2*BS, Ep)

    # --- BatchNorm1d(embed_dim), training mode: separate batch stats per direction ---
    xh = jnp.concatenate([_bn_train(x[:BS]), _bn_train(x[BS:])], axis=0)
    xh = xh * g1_ref[...] + b1_ref[...]

    # --- Linear(embed_dim, pred_dim, bias=False): one fused 2*BS-row MXU matmul ---
    h = jnp.dot(xh.astype(MXU_DTYPE), w1_ref[...].astype(MXU_DTYPE),
                preferred_element_type=jnp.float32)           # (2*BS, Pp)

    # --- BatchNorm1d(pred_dim) + ReLU (per-half stats again) ---
    hh = jnp.concatenate([_bn_train(h[:BS]), _bn_train(h[BS:])], axis=0)
    hh = jnp.maximum(hh * g2_ref[...] + b2_ref[...], 0.0)

    # --- Linear(pred_dim, embed_dim) with bias ---
    p = jnp.dot(hh.astype(MXU_DTYPE), w2_ref[...].astype(MXU_DTYPE),
                preferred_element_type=jnp.float32) + bias2_ref[...]   # (2*BS, Ep)

    # Targets (detach only matters for gradients): first half -> positives, second -> batch.
    t = jnp.concatenate([x[BS:], x[:BS]], axis=0)             # (2*BS, Ep)

    # --- CosineSimilarity(dim=1), eps clamping each norm (modern torch semantics) ---
    dot = jnp.sum(p * t, axis=1, keepdims=True)               # (2*BS, 1)
    psq = jnp.sum(p * p, axis=1, keepdims=True)
    tsq = jnp.sum(t * t, axis=1, keepdims=True)
    cos = dot * jax.lax.rsqrt(jnp.maximum(psq, COS_EPS * COS_EPS)) \
              * jax.lax.rsqrt(jnp.maximum(tsq, COS_EPS * COS_EPS))

    m1 = jnp.mean(cos[:BS], keepdims=True)                    # mean cos(pred(batch), positives)
    m2 = jnp.mean(cos[BS:], keepdims=True)                    # mean cos(pred(positives), batch)
    loss = -(m1 + m2) * 0.5                                   # (1, 1)

    # Lane-dense unmasked store; wrapper reads element [0, 0].
    out_ref[...] = jnp.broadcast_to(loss, out_ref.shape)


def pad_predictor_params(params):
    """Pad parameters to lane multiples ONCE (outside the per-step path). Exact math:
    gamma pads = 1, beta/bias/weight pads = 0 so padded columns stay identically zero."""
    E, P = params["w1"].shape
    Ep, Pp = _round_up(E, _LANE), _round_up(P, _LANE)
    pe, pp = Ep - E, Pp - P
    return {
        "g1": jnp.pad(params["g1"], ((0, 0), (0, pe)), constant_values=1.0),
        "b1": jnp.pad(params["b1"], ((0, 0), (0, pe))),
        "w1": jnp.pad(params["w1"], ((0, pe), (0, pp))),
        "g2": jnp.pad(params["g2"], ((0, 0), (0, pp)), constant_values=1.0),
        "b2": jnp.pad(params["b2"], ((0, 0), (0, pp))),
        "w2": jnp.pad(params["w2"], ((0, pp), (0, pe))),
        "bias2": jnp.pad(params["bias2"], ((0, 0), (0, pe))),
    }


@jax.jit
def simsiam_loss_device(batch, ids_pos, padded_params):
    """One fused kernel call: gather + predictor(x2 directions) + cosine + loss combine."""
    BS, E = batch.shape
    Ep = padded_params["w1"].shape[0]
    if E != Ep:                                  # static check; no-op when E % 128 == 0
        batch = jnp.pad(batch, ((0, 0), (0, Ep - E)))

    vmem = pl.BlockSpec(memory_space=pltpu.MemorySpace.VMEM)
    smem = pl.BlockSpec(memory_space=pltpu.MemorySpace.SMEM)

    out = pl.pallas_call(
        _simsiam_fused_kernel,
        out_shape=jax.ShapeDtypeStruct((8, _LANE), jnp.float32),
        in_specs=[smem,            # ids_pos (scalar indices for in-kernel gather)
                  vmem,            # batch (passed exactly once)
                  vmem, vmem,      # bn1 gamma, beta
                  vmem,            # linear1 weight (in, out)
                  vmem, vmem,      # bn2 gamma, beta
                  vmem,            # linear2 weight (in, out)
                  vmem],           # linear2 bias
        out_specs=vmem,
        scratch_shapes=[pltpu.VMEM((2 * BS, Ep), jnp.float32)],   # stacked [batch; positives]
    )(ids_pos, batch,
      padded_params["g1"], padded_params["b1"], padded_params["w1"],
      padded_params["g2"], padded_params["b2"], padded_params["w2"],
      padded_params["bias2"])

    return out[0, 0]


def init_predictor_params(key, embed_dim, pred_dim):
    """Deterministic synthetic init matching the module's parameter shapes."""
    k1, k2, k3 = jax.random.split(key, 3)
    bound1 = 1.0 / np.sqrt(embed_dim)
    bound2 = 1.0 / np.sqrt(pred_dim)
    return {
        "g1": jnp.ones((1, embed_dim), jnp.float32),          # BatchNorm1d(embed_dim).weight
        "b1": jnp.zeros((1, embed_dim), jnp.float32),         # BatchNorm1d(embed_dim).bias
        "w1": jax.random.uniform(k1, (embed_dim, pred_dim), jnp.float32,
                                 -bound1, bound1),            # Linear(embed_dim, pred_dim, bias=False)
        "g2": jnp.ones((1, pred_dim), jnp.float32),           # BatchNorm1d(pred_dim).weight
        "b2": jnp.zeros((1, pred_dim), jnp.float32),          # BatchNorm1d(pred_dim).bias
        "w2": jax.random.uniform(k2, (pred_dim, embed_dim), jnp.float32,
                                 -bound2, bound2),            # Linear(pred_dim, embed_dim).weight
        "bias2": jax.random.uniform(k3, (1, embed_dim), jnp.float32,
                                    -bound2, bound2),         # Linear(pred_dim, embed_dim).bias
    }


def mine_positive_ids(labels_np, rng):
    """Vectorized positive mining (same semantics as the torch forward, host-side glue)."""
    labels_np = np.asarray(labels_np).reshape(-1)
    bs = labels_np.shape[0]
    same = labels_np[:, None] == labels_np[None, :]
    if not np.all(same.sum(axis=1) > 0):
        raise Exception("Anchor without positive detected!")
    mask = same.copy()
    multi = same.sum(axis=1) > 1
    idx = np.arange(bs)
    mask[idx[multi], idx[multi]] = False       # drop self when another positive exists
    r = rng.random_sample((bs, bs))
    ids_pos = np.argmax(np.where(mask, r, -1.0), axis=1).astype(np.int32)
    return ids_pos


def simsiam_loss(batch, labels_np, padded_params, rng):
    # loss = -( cos(pred(batch), positives).mean() + cos(pred(positives), batch).mean() ) / 2
    # (warmup detach handling only affects gradients, not the forward value)
    # TODO(synk): BatchNorm running_mean/var momentum updates are not modeled (forward value unaffected).
    ids_pos = jnp.asarray(mine_positive_ids(labels_np, rng), dtype=jnp.int32)
    return simsiam_loss_device(batch, ids_pos, padded_params)


if __name__ == "__main__":
    BS, EMBED_DIM, PRED_DIM = 8, 32, 16

    key = jax.random.PRNGKey(0)
    k_emb, k_par = jax.random.split(key)

    batch = jax.random.normal(k_emb, (BS, EMBED_DIM), jnp.float32)
    # 4 classes, 2 samples each -> every anchor has a positive
    labels_np = np.array([0, 0, 1, 1, 2, 2, 3, 3], dtype=np.int64)

    params = init_predictor_params(k_par, EMBED_DIM, PRED_DIM)
    padded_params = pad_predictor_params(params)   # padded ONCE, outside the per-step path
    rng = np.random.RandomState(0)                 # deterministic positive mining

    loss = simsiam_loss(batch, labels_np, padded_params, rng)
    loss = jax.block_until_ready(loss)
    assert np.isfinite(np.asarray(loss)), "loss is not finite"
    print("KERNEL_OK")
</pallas_src>

<mosaic_0001>
module attributes {stable_mosaic.version = 11 : i64} {
  func.func @_simsiam_fused_kernel(%arg0: memref<8xi32, #tpu.memory_space<smem>>, %arg1: memref<8x128xf32, #tpu.memory_space<vmem>>, %arg2: memref<1x128xf32, #tpu.memory_space<vmem>>, %arg3: memref<1x128xf32, #tpu.memory_space<vmem>>, %arg4: memref<128x128xf32, #tpu.memory_space<vmem>>, %arg5: memref<1x128xf32, #tpu.memory_space<vmem>>, %arg6: memref<1x128xf32, #tpu.memory_space<vmem>>, %arg7: memref<128x128xf32, #tpu.memory_space<vmem>>, %arg8: memref<1x128xf32, #tpu.memory_space<vmem>>, %arg9: memref<8x128xf32, #tpu.memory_space<vmem>>, %arg10: memref<16x128xf32, #tpu.memory_space<vmem>>) attributes {dimension_semantics = [], scalar_prefetch = 0 : i64, scratch_operands = 1 : i64, tpu.core_type = #tpu.core_type<tc>} {
    %c0 = arith.constant 0 : index
    %c0_0 = arith.constant 0 : index
    %0 = vector.load %arg1[%c0, %c0_0] : memref<8x128xf32, #tpu.memory_space<vmem>>, vector<8x128xf32>
    %c0_1 = arith.constant 0 : index
    %c0_2 = arith.constant 0 : index
    %1 = vector.load %arg10[%c0_1, %c0_2] : memref<16x128xf32, #tpu.memory_space<vmem>>, vector<8x128xf32>
    tpu.vector_store %arg10[%c0_1, %c0_2], %0 {strides = array<i32>} : memref<16x128xf32, #tpu.memory_space<vmem>>, vector<8x128xf32>,
    %c0_3 = arith.constant 0 : index
    %2 = memref.load %arg0[%c0_3] : memref<8xi32, #tpu.memory_space<smem>>
    %3 = arith.index_cast %2 : i32 to index
    %c0_4 = arith.constant 0 : index
    %4 = vector.load %arg1[%3, %c0_4] : memref<8x128xf32, #tpu.memory_space<vmem>>, vector<1x128xf32>
    %c8 = arith.constant 8 : index
    %c0_5 = arith.constant 0 : index
    %5 = vector.load %arg10[%c8, %c0_5] : memref<16x128xf32, #tpu.memory_space<vmem>>, vector<1x128xf32>
    tpu.vector_store %arg10[%c8, %c0_5], %4 {strides = array<i32>} : memref<16x128xf32, #tpu.memory_space<vmem>>, vector<1x128xf32>,
    %c1 = arith.constant 1 : index
    %6 = memref.load %arg0[%c1] : memref<8xi32, #tpu.memory_space<smem>>
    %7 = arith.index_cast %6 : i32 to index
    %c0_6 = arith.constant 0 : index
    %8 = vector.load %arg1[%7, %c0_6] : memref<8x128xf32, #tpu.memory_space<vmem>>, vector<1x128xf32>
    %c9 = arith.constant 9 : index
    %c0_7 = arith.constant 0 : index
    %9 = vector.load %arg10[%c9, %c0_7] : memref<16x128xf32, #tpu.memory_space<vmem>>, vector<1x128xf32>
    tpu.vector_store %arg10[%c9, %c0_7], %8 {strides = array<i32>} : memref<16x128xf32, #tpu.memory_space<vmem>>, vector<1x128xf32>,
    %c2 = arith.constant 2 : index
    %10 = memref.load %arg0[%c2] : memref<8xi32, #tpu.memory_space<smem>>
    %11 = arith.index_cast %10 : i32 to index
    %c0_8 = arith.constant 0 : index
    %12 = vector.load %arg1[%11, %c0_8] : memref<8x128xf32, #tpu.memory_space<vmem>>, vector<1x128xf32>
    %c10 = arith.constant 10 : index
    %c0_9 = arith.constant 0 : index
    %13 = vector.load %arg10[%c10, %c0_9] : memref<16x128xf32, #tpu.memory_space<vmem>>, vector<1x128xf32>
    tpu.vector_store %arg10[%c10, %c0_9], %12 {strides = array<i32>} : memref<16x128xf32, #tpu.memory_space<vmem>>, vector<1x128xf32>,
    %c3 = arith.constant 3 : index
    %14 = memref.load %arg0[%c3] : memref<8xi32, #tpu.memory_space<smem>>
    %15 = arith.index_cast %14 : i32 to index
    %c0_10 = arith.constant 0 : index
    %16 = vector.load %arg1[%15, %c0_10] : memref<8x128xf32, #tpu.memory_space<vmem>>, vector<1x128xf32>
    %c11 = arith.constant 11 : index
    %c0_11 = arith.constant 0 : index
    %17 = vector.load %arg10[%c11, %c0_11] : memref<16x128xf32, #tpu.memory_space<vmem>>, vector<1x128xf32>
    tpu.vector_store %arg10[%c11, %c0_11], %16 {strides = array<i32>} : memref<16x128xf32, #tpu.memory_space<vmem>>, vector<1x128xf32>,
    %c4 = arith.constant 4 : index
    %18 = memref.load %arg0[%c4] : memref<8xi32, #tpu.memory_space<smem>>
    %19 = arith.index_cast %18 : i32 to index
    %c0_12 = arith.constant 0 : index
    %20 = vector.load %arg1[%19, %c0_12] : memref<8x128xf32, #tpu.memory_space<vmem>>, vector<1x128xf32>
    %c12 = arith.constant 12 : index
    %c0_13 = arith.constant 0 : index
    %21 = vector.load %arg10[%c12, %c0_13] : memref<16x128xf32, #tpu.memory_space<vmem>>, vector<1x128xf32>
    tpu.vector_store %arg10[%c12, %c0_13], %20 {strides = array<i32>} : memref<16x128xf32, #tpu.memory_space<vmem>>, vector<1x128xf32>,
    %c5 = arith.constant 5 : index
    %22 = memref.load %arg0[%c5] : memref<8xi32, #tpu.memory_space<smem>>
    %23 = arith.index_cast %22 : i32 to index
    %c0_14 = arith.constant 0 : index
    %24 = vector.load %arg1[%23, %c0_14] : memref<8x128xf32, #tpu.memory_space<vmem>>, vector<1x128xf32>
    %c13 = arith.constant 13 : index
    %c0_15 = arith.constant 0 : index
    %25 = vector.load %arg10[%c13, %c0_15] : memref<16x128xf32, #tpu.memory_space<vmem>>, vector<1x128xf32>
    tpu.vector_store %arg10[%c13, %c0_15], %24 {strides = array<i32>} : memref<16x128xf32, #tpu.memory_space<vmem>>, vector<1x128xf32>,
    %c6 = arith.constant 6 : index
    %26 = memref.load %arg0[%c6] : memref<8xi32, #tpu.memory_space<smem>>
    %27 = arith.index_cast %26 : i32 to index
    %c0_16 = arith.constant 0 : index
    %28 = vector.load %arg1[%27, %c0_16] : memref<8x128xf32, #tpu.memory_space<vmem>>, vector<1x128xf32>
    %c14 = arith.constant 14 : index
    %c0_17 = arith.constant 0 : index
    %29 = vector.load %arg10[%c14, %c0_17] : memref<16x128xf32, #tpu.memory_space<vmem>>, vector<1x128xf32>
    tpu.vector_store %arg10[%c14, %c0_17], %28 {strides = array<i32>} : memref<16x128xf32, #tpu.memory_space<vmem>>, vector<1x128xf32>,
    %c7 = arith.constant 7 : index
    %30 = memref.load %arg0[%c7] : memref<8xi32, #tpu.memory_space<smem>>
    %31 = arith.index_cast %30 : i32 to index
    %c0_18 = arith.constant 0 : index
    %32 = vector.load %arg1[%31, %c0_18] : memref<8x128xf32, #tpu.memory_space<vmem>>, vector<1x128xf32>
    %c15 = arith.constant 15 : index
    %c0_19 = arith.constant 0 : index
    %33 = vector.load %arg10[%c15, %c0_19] : memref<16x128xf32, #tpu.memory_space<vmem>>, vector<1x128xf32>
    tpu.vector_store %arg10[%c15, %c0_19], %32 {strides = array<i32>} : memref<16x128xf32, #tpu.memory_space<vmem>>, vector<1x128xf32>,
    %c0_20 = arith.constant 0 : index
    %c0_21 = arith.constant 0 : index
    %34 = vector.load %arg10[%c0_20, %c0_21] : memref<16x128xf32, #tpu.memory_space<vmem>>, vector<16x128xf32>
    %35 = vector.extract_strided_slice %34 {offsets = [0, 0], sizes = [8, 128], strides = [1, 1]} : vector<16x128xf32> to vector<8x128xf32>
    %cst = arith.constant dense<0.000000e+00> : vector<128xf32>
    %36 = vector.multi_reduction <add>, %35, %cst [0] : vector<8x128xf32> to vector<128xf32>
    %37 = vector.shape_cast %36 : vector<128xf32> to vector<1x128xf32>
    %cst_22 = arith.constant 8.000000e+00 : f32
    %38 = vector.broadcast %cst_22 : f32 to vector<1x128xf32>
    %39 = arith.divf %37, %38 : vector<1x128xf32>
    %40 = vector.broadcast %39 : vector<1x128xf32> to vector<8x128xf32>
    %41 = arith.subf %35, %40 : vector<8x128xf32>
    %42 = arith.mulf %41, %41 : vector<8x128xf32>
    %cst_23 = arith.constant dense<0.000000e+00> : vector<128xf32>
    %43 = vector.multi_reduction <add>, %42, %cst_23 [0] : vector<8x128xf32> to vector<128xf32>
    %44 = vector.shape_cast %43 : vector<128xf32> to vector<1x128xf32>
    %cst_24 = arith.constant 8.000000e+00 : f32
    %45 = vector.broadcast %cst_24 : f32 to vector<1x128xf32>
    %46 = arith.divf %44, %45 : vector<1x128xf32>
    %47 = vector.broadcast %39 : vector<1x128xf32> to vector<8x128xf32>
    %48 = arith.subf %35, %47 : vector<8x128xf32>
    %cst_25 = arith.constant 9.99999974E-6 : f32
    %49 = vector.broadcast %cst_25 : f32 to vector<1x128xf32>
    %50 = arith.addf %46, %49 : vector<1x128xf32>
    %51 = math.rsqrt %50 : vector<1x128xf32>
    %52 = vector.broadcast %51 : vector<1x128xf32> to vector<8x128xf32>
    %53 = arith.mulf %48, %52 : vector<8x128xf32>
    %54 = vector.extract_strided_slice %34 {offsets = [8, 0], sizes = [8, 128], strides = [1, 1]} : vector<16x128xf32> to vector<8x128xf32>
    %cst_26 = arith.constant dense<0.000000e+00> : vector<128xf32>
    %55 = vector.multi_reduction <add>, %54, %cst_26 [0] : vector<8x128xf32> to vector<128xf32>
    %56 = vector.shape_cast %55 : vector<128xf32> to vector<1x128xf32>
    %cst_27 = arith.constant 8.000000e+00 : f32
    %57 = vector.broadcast %cst_27 : f32 to vector<1x128xf32>
    %58 = arith.divf %56, %57 : vector<1x128xf32>
    %59 = vector.broadcast %58 : vector<1x128xf32> to vector<8x128xf32>
    %60 = arith.subf %54, %59 : vector<8x128xf32>
    %61 = arith.mulf %60, %60 : vector<8x128xf32>
    %cst_28 = arith.constant dense<0.000000e+00> : vector<128xf32>
    %62 = vector.multi_reduction <add>, %61, %cst_28 [0] : vector<8x128xf32> to vector<128xf32>
    %63 = vector.shape_cast %62 : vector<128xf32> to vector<1x128xf32>
    %cst_29 = arith.constant 8.000000e+00 : f32
    %64 = vector.broadcast %cst_29 : f32 to vector<1x128xf32>
    %65 = arith.divf %63, %64 : vector<1x128xf32>
    %66 = vector.broadcast %58 : vector<1x128xf32> to vector<8x128xf32>
    %67 = arith.subf %54, %66 : vector<8x128xf32>
    %cst_30 = arith.constant 9.99999974E-6 : f32
    %68 = vector.broadcast %cst_30 : f32 to vector<1x128xf32>
    %69 = arith.addf %65, %68 : vector<1x128xf32>
    %70 = math.rsqrt %69 : vector<1x128xf32>
    %71 = vector.broadcast %70 : vector<1x128xf32> to vector<8x128xf32>
    %72 = arith.mulf %67, %71 : vector<8x128xf32>
    %73 = tpu.concatenate %53, %72 in 0 : vector<8x128xf32>, vector<8x128xf32> -> vector<16x128xf32>
    %c0_31 = arith.constant 0 : index
    %c0_32 = arith.constant 0 : index
    %74 = vector.load %arg2[%c0_31, %c0_32] : memref<1x128xf32, #tpu.memory_space<vmem>>, vector<1x128xf32>
    %75 = vector.broadcast %74 : vector<1x128xf32> to vector<16x128xf32>
    %76 = arith.mulf %73, %75 : vector<16x128xf32>
    %c0_33 = arith.constant 0 : index
    %c0_34 = arith.constant 0 : index
    %77 = vector.load %arg3[%c0_33, %c0_34] : memref<1x128xf32, #tpu.memory_space<vmem>>, vector<1x128xf32>
    %78 = vector.broadcast %77 : vector<1x128xf32> to vector<16x128xf32>
    %79 = arith.addf %76, %78 : vector<16x128xf32>
    %c0_35 = arith.constant 0 : index
    %c0_36 = arith.constant 0 : index
    %80 = vector.load %arg4[%c0_35, %c0_36] : memref<128x128xf32, #tpu.memory_space<vmem>>, vector<128x128xf32>
    %cst_37 = arith.constant dense<0.000000e+00> : vector<16x128xf32>
    %81 = tpu.matmul %79, %80, %cst_37 {dimension_numbers = #tpu.dot_dimension_numbers<[1], [0], [0], [1], [0, 0, 1, 1], [], []>} : vector<16x128xf32>, vector<128x128xf32>, vector<16x128xf32> -> vector<16x128xf32>
    %82 = vector.extract_strided_slice %81 {offsets = [0, 0], sizes = [8, 128], strides = [1, 1]} : vector<16x128xf32> to vector<8x128xf32>
    %cst_38 = arith.constant dense<0.000000e+00> : vector<128xf32>
    %83 = vector.multi_reduction <add>, %82, %cst_38 [0] : vector<8x128xf32> to vector<128xf32>
    %84 = vector.shape_cast %83 : vector<128xf32> to vector<1x128xf32>
    %cst_39 = arith.constant 8.000000e+00 : f32
    %85 = vector.broadcast %cst_39 : f32 to vector<1x128xf32>
    %86 = arith.divf %84, %85 : vector<1x128xf32>
    %87 = vector.broadcast %86 : vector<1x128xf32> to vector<8x128xf32>
    %88 = arith.subf %82, %87 : vector<8x128xf32>
    %89 = arith.mulf %88, %88 : vector<8x128xf32>
    %cst_40 = arith.constant dense<0.000000e+00> : vector<128xf32>
    %90 = vector.multi_reduction <add>, %89, %cst_40 [0] : vector<8x128xf32> to vector<128xf32>
    %91 = vector.shape_cast %90 : vector<128xf32> to vector<1x128xf32>
    %cst_41 = arith.constant 8.000000e+00 : f32
    %92 = vector.broadcast %cst_41 : f32 to vector<1x128xf32>
    %93 = arith.divf %91, %92 : vector<1x128xf32>
    %94 = vector.broadcast %86 : vector<1x128xf32> to vector<8x128xf32>
    %95 = arith.subf %82, %94 : vector<8x128xf32>
    %cst_42 = arith.constant 9.99999974E-6 : f32
    %96 = vector.broadcast %cst_42 : f32 to vector<1x128xf32>
    %97 = arith.addf %93, %96 : vector<1x128xf32>
    %98 = math.rsqrt %97 : vector<1x128xf32>
    %99 = vector.broadcast %98 : vector<1x128xf32> to vector<8x128xf32>
    %100 = arith.mulf %95, %99 : vector<8x128xf32>
    %101 = vector.extract_strided_slice %81 {offsets = [8, 0], sizes = [8, 128], strides = [1, 1]} : vector<16x128xf32> to vector<8x128xf32>
    %cst_43 = arith.constant dense<0.000000e+00> : vector<128xf32>
    %102 = vector.multi_reduction <add>, %101, %cst_43 [0] : vector<8x128xf32> to vector<128xf32>
    %103 = vector.shape_cast %102 : vector<128xf32> to vector<1x128xf32>
    %cst_44 = arith.constant 8.000000e+00 : f32
    %104 = vector.broadcast %cst_44 : f32 to vector<1x128xf32>
    %105 = arith.divf %103, %104 : vector<1x128xf32>
    %106 = vector.broadcast %105 : vector<1x128xf32> to vector<8x128xf32>
    %107 = arith.subf %101, %106 : vector<8x128xf32>
    %108 = arith.mulf %107, %107 : vector<8x128xf32>
    %cst_45 = arith.constant dense<0.000000e+00> : vector<128xf32>
    %109 = vector.multi_reduction <add>, %108, %cst_45 [0] : vector<8x128xf32> to vector<128xf32>
    %110 = vector.shape_cast %109 : vector<128xf32> to vector<1x128xf32>
    %cst_46 = arith.constant 8.000000e+00 : f32
    %111 = vector.broadcast %cst_46 : f32 to vector<1x128xf32>
    %112 = arith.divf %110, %111 : vector<1x128xf32>
    %113 = vector.broadcast %105 : vector<1x128xf32> to vector<8x128xf32>
    %114 = arith.subf %101, %113 : vector<8x128xf32>
    %cst_47 = arith.constant 9.99999974E-6 : f32
    %115 = vector.broadcast %cst_47 : f32 to vector<1x128xf32>
    %116 = arith.addf %112, %115 : vector<1x128xf32>
    %117 = math.rsqrt %116 : vector<1x128xf32>
    %118 = vector.broadcast %117 : vector<1x128xf32> to vector<8x128xf32>
    %119 = arith.mulf %114, %118 : vector<8x128xf32>
    %120 = tpu.concatenate %100, %119 in 0 : vector<8x128xf32>, vector<8x128xf32> -> vector<16x128xf32>
    %c0_48 = arith.constant 0 : index
    %c0_49 = arith.constant 0 : index
    %121 = vector.load %arg5[%c0_48, %c0_49] : memref<1x128xf32, #tpu.memory_space<vmem>>, vector<1x128xf32>
    %122 = vector.broadcast %121 : vector<1x128xf32> to vector<16x128xf32>
    %123 = arith.mulf %120, %122 : vector<16x128xf32>
    %c0_50 = arith.constant 0 : index
    %c0_51 = arith.constant 0 : index
    %124 = vector.load %arg6[%c0_50, %c0_51] : memref<1x128xf32, #tpu.memory_space<vmem>>, vector<1x128xf32>
    %125 = vector.broadcast %124 : vector<1x128xf32> to vector<16x128xf32>
    %126 = arith.addf %123, %125 : vector<16x128xf32>
    %cst_52 = arith.constant 0.000000e+00 : f32
    %127 = vector.broadcast %cst_52 : f32 to vector<16x128xf32>
    %128 = arith.maximumf %126, %127 : vector<16x128xf32>
    %c0_53 = arith.constant 0 : index
    %c0_54 = arith.constant 0 : index
    %129 = vector.load %arg7[%c0_53, %c0_54] : memref<128x128xf32, #tpu.memory_space<vmem>>, vector<128x128xf32>
    %cst_55 = arith.constant dense<0.000000e+00> : vector<16x128xf32>
    %130 = tpu.matmul %128, %129, %cst_55 {dimension_numbers = #tpu.dot_dimension_numbers<[1], [0], [0], [1], [0, 0, 1, 1], [], []>} : vector<16x128xf32>, vector<128x128xf32>, vector<16x128xf32> -> vector<16x128xf32>
    %c0_56 = arith.constant 0 : index
    %c0_57 = arith.constant 0 : index
    %131 = vector.load %arg8[%c0_56, %c0_57] : memref<1x128xf32, #tpu.memory_space<vmem>>, vector<1x128xf32>
    %132 = vector.broadcast %131 : vector<1x128xf32> to vector<16x128xf32>
    %133 = arith.addf %130, %132 : vector<16x128xf32>
    %134 = vector.extract_strided_slice %34 {offsets = [8, 0], sizes = [8, 128], strides = [1, 1]} : vector<16x128xf32> to vector<8x128xf32>
    %135 = vector.extract_strided_slice %34 {offsets = [0, 0], sizes = [8, 128], strides = [1, 1]} : vector<16x128xf32> to vector<8x128xf32>
    %136 = tpu.concatenate %134, %135 in 0 : vector<8x128xf32>, vector<8x128xf32> -> vector<16x128xf32>
    %137 = arith.mulf %133, %136 : vector<16x128xf32>
    %cst_58 = arith.constant dense<0.000000e+00> : vector<16xf32>
    %138 = vector.multi_reduction <add>, %137, %cst_58 [1] : vector<16x128xf32> to vector<16xf32>
    %139 = vector.shape_cast %138 : vector<16xf32> to vector<16x1xf32>
    %140 = arith.mulf %133, %133 : vector<16x128xf32>
    %cst_59 = arith.constant dense<0.000000e+00> : vector<16xf32>
    %141 = vector.multi_reduction <add>, %140, %cst_59 [1] : vector<16x128xf32> to vector<16xf32>
    %142 = vector.shape_cast %141 : vector<16xf32> to vector<16x1xf32>
    %143 = arith.mulf %136, %136 : vector<16x128xf32>
    %cst_60 = arith.constant dense<0.000000e+00> : vector<16xf32>
    %144 = vector.multi_reduction <add>, %143, %cst_60 [1] : vector<16x128xf32> to vector<16xf32>
    %145 = vector.shape_cast %144 : vector<16xf32> to vector<16x1xf32>
    %cst_61 = arith.constant 1.000000e-16 : f32
    %146 = vector.broadcast %cst_61 : f32 to vector<16x1xf32>
    %147 = arith.maximumf %142, %146 : vector<16x1xf32>
    %148 = math.rsqrt %147 : vector<16x1xf32>
    %149 = arith.mulf %139, %148 : vector<16x1xf32>
    %cst_62 = arith.constant 1.000000e-16 : f32
    %150 = vector.broadcast %cst_62 : f32 to vector<16x1xf32>
    %151 = arith.maximumf %145, %150 : vector<16x1xf32>
    %152 = math.rsqrt %151 : vector<16x1xf32>
    %153 = arith.mulf %149, %152 : vector<16x1xf32>
    %154 = vector.extract_strided_slice %153 {offsets = [0, 0], sizes = [8, 1], strides = [1, 1]} : vector<16x1xf32> to vector<8x1xf32>
    %155 = vector.shape_cast %154 : vector<8x1xf32> to vector<1x8x1xf32>
    %cst_63 = arith.constant dense<0.000000e+00> : vector<1xf32>
    %156 = vector.multi_reduction <add>, %155, %cst_63 [1, 2] : vector<1x8x1xf32> to vector<1xf32>
    %157 = vector.shape_cast %156 : vector<1xf32> to vector<1x1x1xf32>
    %158 = vector.extract %157[0, 0, 0] : f32 from vector<1x1x1xf32>
    %159 = vector.broadcast %158 : f32 to vector<1x1xf32>
    %cst_64 = arith.constant 8.000000e+00 : f32
    %160 = vector.broadcast %cst_64 : f32 to vector<1x1xf32>
    %161 = arith.divf %159, %160 : vector<1x1xf32>
    %162 = vector.extract_strided_slice %153 {offsets = [8, 0], sizes = [8, 1], strides = [1, 1]} : vector<16x1xf32> to vector<8x1xf32>
    %163 = vector.shape_cast %162 : vector<8x1xf32> to vector<1x8x1xf32>
    %cst_65 = arith.constant dense<0.000000e+00> : vector<1xf32>
    %164 = vector.multi_reduction <add>, %163, %cst_65 [1, 2] : vector<1x8x1xf32> to vector<1xf32>
    %165 = vector.shape_cast %164 : vector<1xf32> to vector<1x1x1xf32>
    %166 = vector.extract %165[0, 0, 0] : f32 from vector<1x1x1xf32>
    %167 = vector.broadcast %166 : f32 to vector<1x1xf32>
    %cst_66 = arith.constant 8.000000e+00 : f32
    %168 = vector.broadcast %cst_66 : f32 to vector<1x1xf32>
    %169 = arith.divf %167, %168 : vector<1x1xf32>
    %170 = arith.addf %161, %169 : vector<1x1xf32>
    %cst_67 = arith.constant 0.000000e+00 : f32
    %171 = vector.broadcast %cst_67 : f32 to vector<1x1xf32>
    %172 = arith.subf %171, %170 : vector<1x1xf32>
    %cst_68 = arith.constant 5.000000e-01 : f32
    %173 = vector.broadcast %cst_68 : f32 to vector<1x1xf32>
    %174 = arith.mulf %172, %173 : vector<1x1xf32>
    %175 = vector.shape_cast %174 : vector<1x1xf32> to vector<1x1xf32>
    %176 = vector.broadcast %175 : vector<1x1xf32> to vector<8x128xf32>
    %c0_69 = arith.constant 0 : index
    %c0_70 = arith.constant 0 : index
    %177 = vector.load %arg9[%c0_69, %c0_70] : memref<8x128xf32, #tpu.memory_space<vmem>>, vector<8x128xf32>
    tpu.vector_store %arg9[%c0_69, %c0_70], %176 {strides = array<i32>} : memref<8x128xf32, #tpu.memory_space<vmem>>, vector<8x128xf32>,
    return
  }
}

</mosaic_0001>

<llo_original>
// kernel: simsiam_loss_device.1
$region0: #{simsiam_loss_device.1}
  #allocation0 [shape = 'u32[]', space=smem, size = 0x4, offset = 0x4, fixed_abs, tag = 'smem constant byte address 0x4 - core index']
  #allocation1 [shape = 'u32[144,128]{1,0:T(1,128)}', space=vmem, size = 0x12000, scoped, tag = 'internal scratch']
  #allocation2 [shape = 'f32[16,128]{1,0:T(8,128)}', space=vmem, size = 0x2000, scoped, tag = 'scratch operand']
  %s0 = inlined_call_operand.vmem [shape: s32[8], index: 0, kind: input, shape index: {}]
  %s1 = inlined_call_operand.vmem [shape: f32[8,128], index: 1, kind: input, shape index: {}]
  %s2 = inlined_call_operand.vmem [shape: f32[1,128], index: 2, kind: input, shape index: {}]
  %s3 = inlined_call_operand.vmem [shape: f32[1,128], index: 3, kind: input, shape index: {}]
  %s4 = inlined_call_operand.hbm [shape: f32[128,128], index: 4, kind: input, shape index: {}]
  %s5 = inlined_call_operand.vmem [shape: f32[1,128], index: 5, kind: input, shape index: {}]
  %s6 = inlined_call_operand.vmem [shape: f32[1,128], index: 6, kind: input, shape index: {}]
  %s7 = inlined_call_operand.hbm [shape: f32[128,128], index: 7, kind: input, shape index: {}]
  %s8 = inlined_call_operand.vmem [shape: f32[1,128], index: 8, kind: input, shape index: {}]
  %s9 = inlined_call_operand.vmem [shape: f32[8,128], index: 9, kind: output, shape index: {}]
  %s10 = sld [smem:[#allocation0]]
  $region58: #{simsiam_loss_device.1} parent=0
    _
  %s12 = ssub.s32 1, %s10
  %s13 = scalar_select 0, %s12, %s10
  $region1: #{simsiam_loss_device.1} parent=0
    #allocation3 [shape = 'u8[512]{0}', space=smem, size = 0x200, scoped, tag = 'input window, operand 0, single buffered']
    #allocation4 [shape = 's32[1]{0}', space=sflag, size = 0x4, scoped, tag = 'scoped memory for simsiam_loss_device.1']
    #allocation5 [shape = 's32[1]{0}', space=sflag, size = 0x4, scoped, tag = 'scoped memory for simsiam_loss_device.1']
    #allocation6 [shape = 'u8[65536]{0}', space=vmem, size = 0x10000, scoped, tag = 'input window, operand 4, single buffered']
    #allocation7 [shape = 'u8[65536]{0}', space=vmem, size = 0x10000, scoped, tag = 'input window, operand 7, single buffered']
    #allocation8 [shape = 's32[1]{0}', space=sflag, size = 0x4, scoped, tag = 'scoped memory for simsiam_loss_device.1']
    %14 = vsyncpa [#allocation5], 0
    %15 = vsyncpa [#allocation4], 0
    %16 = vsyncpa [#allocation8], 0
    // Predicated region
    $region2: #{simsiam_loss_device.1} parent=1 // pred_check
      _
    $region3: #{simsiam_loss_device.1} parent=1 // pred_check_branch
      %18 = sbr.rel (0) target = $region5
    $region4: #{simsiam_loss_device.1} parent=1 // pred_region
      %s20 = ssub.s32 16, 16
      %21 = vsyncadd [#allocation5], %s20
      %s23 = sshll.u32 %s0, 4
      %s24 = int_to_ptr.vmem [resolvable:$true] %s23
      %26 = dma.vmem_to_smem %s24, 16, [#allocation3], [#allocation5]
    $region5: #{simsiam_loss_device.1} parent=1 // pred_fallthru
      _
    // Predicated region
    $region6: #{simsiam_loss_device.1} parent=1 // pred_check
      _
    $region7: #{simsiam_loss_device.1} parent=1 // pred_check_branch
      %28 = sbr.rel (0) target = $region9
    $region8: #{simsiam_loss_device.1} parent=1 // pred_region
      _
    $region9: #{simsiam_loss_device.1} parent=1 // pred_fallthru
      _
    // Predicated region
    $region10: #{simsiam_loss_device.1} parent=1 // pred_check
      _
    $region11: #{simsiam_loss_device.1} parent=1 // pred_check_branch
      %30 = sbr.rel (0) target = $region13
    $region12: #{simsiam_loss_device.1} parent=1 // pred_region
      _
    $region13: #{simsiam_loss_device.1} parent=1 // pred_fallthru
      _
    // Predicated region
    $region14: #{simsiam_loss_device.1} parent=1 // pred_check
      _
    $region15: #{simsiam_loss_device.1} parent=1 // pred_check_branch
      %32 = sbr.rel (0) target = $region17
    $region16: #{simsiam_loss_device.1} parent=1 // pred_region
      _
    $region17: #{simsiam_loss_device.1} parent=1 // pred_fallthru
      _
    // Predicated region
    $region18: #{simsiam_loss_device.1} parent=1 // pred_check
      _
    $region19: #{simsiam_loss_device.1} parent=1 // pred_check_branch
      %34 = sbr.rel (0) target = $region21
    $region20: #{simsiam_loss_device.1} parent=1 // pred_region
      %s36 = ssub.s32 2048, 2048
      %37 = vsyncadd [#allocation4], %s36
      %s38 = sshll.u32 [#allocation6], 4
      %s39 = int_to_ptr.vmem [resolvable:$true] %s38
      %44 = dma.hbm_to_vmem [thread:$0]  %s4, 2048, %s39, [#allocation4], 128, 128, 8
    $region21: #{simsiam_loss_device.1} parent=1 // pred_fallthru
      _
    // Predicated region
    $region22: #{simsiam_loss_device.1} parent=1 // pred_check
      _
    $region23: #{simsiam_loss_device.1} parent=1 // pred_check_branch
      %46 = sbr.rel (0) target = $region25
    $region24: #{simsiam_loss_device.1} parent=1 // pred_region
      _
    $region25: #{simsiam_loss_device.1} parent=1 // pred_fallthru
      _
    // Predicated region
    $region26: #{simsiam_loss_device.1} parent=1 // pred_check
      _
    $region27: #{simsiam_loss_device.1} parent=1 // pred_check_branch
      %48 = sbr.rel (0) target = $region29
    $region28: #{simsiam_loss_device.1} parent=1 // pred_region
      _
    $region29: #{simsiam_loss_device.1} parent=1 // pred_fallthru
      _
    // Predicated region
    $region30: #{simsiam_loss_device.1} parent=1 // pred_check
      _
    $region31: #{simsiam_loss_device.1} parent=1 // pred_check_branch
      %50 = sbr.rel (0) target = $region33
    $region32: #{simsiam_loss_device.1} parent=1 // pred_region
      %s52 = ssub.s32 2048, 2048
      %53 = vsyncadd [#allocation8], %s52
      %s54 = sshll.u32 [#allocation7], 4
      %s55 = int_to_ptr.vmem [resolvable:$true] %s54
      %60 = dma.hbm_to_vmem [thread:$0]  %s7, 2048, %s55, [#allocation8], 128, 128, 8
    $region33: #{simsiam_loss_device.1} parent=1 // pred_fallthru
      _
    // Predicated region
    $region34: #{simsiam_loss_device.1} parent=1 // pred_check
      _
    $region35: #{simsiam_loss_device.1} parent=1 // pred_check_branch
      %62 = sbr.rel (0) target = $region37
    $region36: #{simsiam_loss_device.1} parent=1 // pred_region
      _
    $region37: #{simsiam_loss_device.1} parent=1 // pred_fallthru
      _
    // Predicated region
    $region38: #{simsiam_loss_device.1} parent=1 // pred_check
      _
    $region39: #{simsiam_loss_device.1} parent=1 // pred_check_branch
      %64 = sbr.rel (0) target = $region41
    $region40: #{simsiam_loss_device.1} parent=1 // pred_region
      %65 = dma.done [#allocation5], 16
    $region41: #{simsiam_loss_device.1} parent=1 // pred_fallthru
      _
    // Predicated region
    $region42: #{simsiam_loss_device.1} parent=1 // pred_check
      _
    $region43: #{simsiam_loss_device.1} parent=1 // pred_check_branch
      %67 = sbr.rel (0) target = $region45
    $region44: #{simsiam_loss_device.1} parent=1 // pred_region
      %68 = dma.done [#allocation4], 2048
    $region45: #{simsiam_loss_device.1} parent=1 // pred_fallthru
      _
    // Predicated region
    $region46: #{simsiam_loss_device.1} parent=1 // pred_check
      _
    $region47: #{simsiam_loss_device.1} parent=1 // pred_check_branch
      %70 = sbr.rel (0) target = $region49
    $region48: #{simsiam_loss_device.1} parent=1 // pred_region
      %71 = dma.done [#allocation8], 2048
    $region49: #{simsiam_loss_device.1} parent=1 // pred_fallthru
      _
    %72 = sfence
    %v73 = vld [vmem:[%s1] sm:$0xff]
    %74 = vst [vmem:[#allocation2] sm:$0xff] %v73
    %s75 = sld [smem:[#allocation3]]
    %s76 = scalar_lea.vmem %s1, %s75
    %v77 = vld [vmem:[%s76] sm:$0x1]
    %78 = vst [vmem:[#allocation2 + $0x8] sm:$0x1] %v77
    %s79 = sld [smem:[#allocation3 + $0x1]]
    %s80 = scalar_lea.vmem %s1, %s79
    %v81 = vld [vmem:[%s80] sm:$0x1]
    %82 = vst [vmem:[#allocation2 + $0x9] sm:$0x1] %v81
    %s83 = sld [smem:[#allocation3 + $0x2]]
    %s84 = scalar_lea.vmem %s1, %s83
    %v85 = vld [vmem:[%s84] sm:$0x1]
    %86 = vst [vmem:[#allocation2 + $0xa] sm:$0x1] %v85
    %s87 = sld [smem:[#allocation3 + $0x3]]
    %s88 = scalar_lea.vmem %s1, %s87
    %v89 = vld [vmem:[%s88] sm:$0x1]
    %90 = vst [vmem:[#allocation2 + $0xb] sm:$0x1] %v89
    %s91 = sld [smem:[#allocation3 + $0x4]]
    %s92 = scalar_lea.vmem %s1, %s91
    %v93 = vld [vmem:[%s92] sm:$0x1]
    %94 = vst [vmem:[#allocation2 + $0xc] sm:$0x1] %v93
    %s95 = sld [smem:[#allocation3 + $0x5]]
    %s96 = scalar_lea.vmem %s1, %s95
    %v97 = vld [vmem:[%s96] sm:$0x1]
    %98 = vst [vmem:[#allocation2 + $0xd] sm:$0x1] %v97
    %s99 = sld [smem:[#allocation3 + $0x6]]
    %s100 = scalar_lea.vmem %s1, %s99
    %v101 = vld [vmem:[%s100] sm:$0x1]
    %102 = vst [vmem:[#allocation2 + $0xe] sm:$0x1] %v101
    %s103 = sld [smem:[#allocation3 + $0x7]]
    %s104 = scalar_lea.vmem %s1, %s103
    %v105 = vld [vmem:[%s104] sm:$0x1]
    %106 = vst [vmem:[#allocation2 + $0xf] sm:$0x1] %v105
    %v107 = vld [vmem:[#allocation2] sm:$0xff]
    %v108 = vld [vmem:[#allocation2 + $0x8] sm:$0xff]
    %v109 = vrot.slane %v107, 4
    %v110 = vadd.f32 %v107, %v109
    %v111 = vrot.slane %v110, 2
    %v112 = vadd.f32 %v110, %v111
    %v113 = vrot.slane %v112, 1
    %v114 = vadd.f32 %v112, %v113
    %v115 = vrcp.pop 8.0
    %v116 = vmul.f32 %v114, %v115
    %v117 = vsub.f32 %v107, %v116
    %v118 = vmul.f32 %v117, %v117
    %v119 = vrot.slane %v118, 4
    %v120 = vadd.f32 %v118, %v119
    %v121 = vrot.slane %v120, 2
    %v122 = vadd.f32 %v120, %v121
    %v123 = vrot.slane %v122, 1
    %v124 = vadd.f32 %v122, %v123
    %v125 = vmul.f32 %v124, %v115
    %v126 = vadd.f32 %v125, 1e-05
    %v127 = vrsqrt.pop %v126
    %v128 = vmul.f32 %v117, %v127
    %v129 = vrot.slane %v108, 4
    %v130 = vadd.f32 %v108, %v129
    %v131 = vrot.slane %v130, 2
    %v132 = vadd.f32 %v130, %v131
    %v133 = vrot.slane %v132, 1
    %v134 = vadd.f32 %v132, %v133
    %v135 = vmul.f32 %v134, %v115
    %v136 = vsub.f32 %v108, %v135
    %v137 = vmul.f32 %v136, %v136
    %v138 = vrot.slane %v137, 4
    %v139 = vadd.f32 %v137, %v138
    %v140 = vrot.slane %v139, 2
    %v141 = vadd.f32 %v139, %v140
    %v142 = vrot.slane %v141, 1
    %v143 = vadd.f32 %v141, %v142
    %v144 = vmul.f32 %v143, %v115
    %v145 = vadd.f32 %v144, 1e-05
    %v146 = vrsqrt.pop %v145
    %v147 = vmul.f32 %v136, %v146
    %v148 = vld [vmem:[%s2] sm:$0x1]
    %v150 = vlaneseq
    %v151 = vshrl.u32 %v150, 7
    %v152 = vsub.s32 0, %v151
    %v153 = vrot.slane %v148, %v152
    %v155 = vmul.f32 %v128, %v153
    %v156 = vmul.f32 %v147, %v153
    %v157 = vld [vmem:[%s3] sm:$0x1]
    %v159 = vlaneseq
    %v160 = vshrl.u32 %v159, 7
    %v161 = vsub.s32 0, %v160
    %v162 = vrot.slane %v157, %v161
    %v164 = vadd.f32 %v155, %v162
    %v165 = vadd.f32 %v156, %v162
    %v166 = vld [vmem:[#allocation6] sm:$0xff]
    %v167 = vld [vmem:[#allocation6 + $0x8] sm:$0xff]
    %v168 = vld [vmem:[#allocation6 + $0x10] sm:$0xff]
    %v169 = vld [vmem:[#allocation6 + $0x18] sm:$0xff]
    %v170 = vld [vmem:[#allocation6 + $0x20] sm:$0xff]
    %v171 = vld [vmem:[#allocation6 + $0x28] sm:$0xff]
    %v172 = vld [vmem:[#allocation6 + $0x30] sm:$0xff]
    %v173 = vld [vmem:[#allocation6 + $0x38] sm:$0xff]
    %v174 = vld [vmem:[#allocation6 + $0x40] sm:$0xff]
    %v175 = vld [vmem:[#allocation6 + $0x48] sm:$0xff]
    %v176 = vld [vmem:[#allocation6 + $0x50] sm:$0xff]
    %v177 = vld [vmem:[#allocation6 + $0x58] sm:$0xff]
    %v178 = vld [vmem:[#allocation6 + $0x60] sm:$0xff]
    %v179 = vld [vmem:[#allocation6 + $0x68] sm:$0xff]
    %v180 = vld [vmem:[#allocation6 + $0x70] sm:$0xff]
    %v181 = vld [vmem:[#allocation6 + $0x78] sm:$0xff]
    %182 = vmatprep.subr.mxu0 0.0
    %183 = vmatpush1.msra.mxu0 %v181
    %184 = vmatprep.subr.mxu0 0.0
    %185 = vmatpush1.msra.mxu0 %v180
    %186 = vmatprep.subr.mxu0 0.0
    %187 = vmatpush1.msra.mxu0 %v179
    %188 = vmatprep.subr.mxu0 0.0
    %189 = vmatpush1.msra.mxu0 %v178
    %190 = vmatprep.subr.mxu0 0.0
    %191 = vmatpush1.msra.mxu0 %v177
    %192 = vmatprep.subr.mxu0 0.0
    %193 = vmatpush1.msra.mxu0 %v176
    %194 = vmatprep.subr.mxu0 0.0
    %195 = vmatpush1.msra.mxu0 %v175
    %196 = vmatprep.subr.mxu0 0.0
    %197 = vmatpush1.msra.mxu0 %v174
    %198 = vmatprep.subr.mxu0 0.0
    %199 = vmatpush1.msra.mxu0 %v173
    %200 = vmatprep.subr.mxu0 0.0
    %201 = vmatpush1.msra.mxu0 %v172
    %202 = vmatprep.subr.mxu0 0.0
    %203 = vmatpush1.msra.mxu0 %v171
    %204 = vmatprep.subr.mxu0 0.0
    %205 = vmatpush1.msra.mxu0 %v170
    %206 = vmatprep.subr.mxu0 0.0
    %207 = vmatpush1.msra.mxu0 %v169
    %208 = vmatprep.subr.mxu0 0.0
    %209 = vmatpush1.msra.mxu0 %v168
    %210 = vmatprep.subr.mxu0 0.0
    %211 = vmatpush1.msra.mxu0 %v167
    %212 = vmatprep.subr.mxu0 0.0
    %213 = vmatpush1.msra.mxu0 %v166
    %214 = vmatprep.subr.mxu0 0.0
    %215 = vmatpush2.msra.mxu0 0.0
    %216 = vmatprep.subr.mxu0 0.0
    %217 = vmatpush2.msra.mxu0 0.0
    %218 = vmatprep.subr.mxu0 0.0
    %219 = vmatpush2.msra.mxu0 0.0
    %220 = vmatprep.subr.mxu0 0.0
    %221 = vmatpush2.msra.mxu0 0.0
    %222 = vmatprep.subr.mxu0 0.0
    %223 = vmatpush2.msra.mxu0 0.0
    %224 = vmatprep.subr.mxu0 0.0
    %225 = vmatpush2.msra.mxu0 0.0
    %226 = vmatprep.subr.mxu0 0.0
    %227 = vmatpush2.msra.mxu0 0.0
    %228 = vmatprep.subr.mxu0 0.0
    %229 = vmatpush2.msra.mxu0 0.0
    %230 = vmatprep.subr.mxu0 0.0
    %231 = vmatpush2.msra.mxu0 0.0
    %232 = vmatprep.subr.mxu0 0.0
    %233 = vmatpush2.msra.mxu0 0.0
    %234 = vmatprep.subr.mxu0 0.0
    %235 = vmatpush2.msra.mxu0 0.0
    %236 = vmatprep.subr.mxu0 0.0
    %237 = vmatpush2.msra.mxu0 0.0
    %238 = vmatprep.subr.mxu0 0.0
    %239 = vmatpush2.msra.mxu0 0.0
    %240 = vmatprep.subr.mxu0 0.0
    %241 = vmatpush2.msra.mxu0 0.0
    %242 = vmatprep.subr.mxu0 0.0
    %243 = vmatpush2.msra.mxu0 0.0
    %244 = vmatprep.subr.mxu0 0.0
    %245 = vmatpush2.msra.mxu0 0.0
    %246 = vmatprep.mubr.f32.mxu0 0.0
    %247 = vmatmul.mubr.f32.gmra.mxu0 %v164
    %v248 = vpop.f32.mrf.mxu0
    %v249 = vadd.f32 0.0, %v248
    %v250 = vpop.f32.mrf.mxu0
    %251 = vmatprep.mubr.f32.mxu0 0.0
    %252 = vmatmul.mubr.f32.gmra.mxu0 %v165
    %v253 = vpop.f32.mrf.mxu0
    %v254 = vadd.f32 0.0, %v253
    %v255 = vpop.f32.mrf.mxu0
    %256 = vdwg.mxu0
    %v257 = vrot.slane %v249, 4
    %v258 = vadd.f32 %v249, %v257
    %v259 = vrot.slane %v258, 2
    %v260 = vadd.f32 %v258, %v259
    %v261 = vrot.slane %v260, 1
    %v262 = vadd.f32 %v260, %v261
    %v263 = vmul.f32 %v262, %v115
    %v264 = vsub.f32 %v249, %v263
    %v265 = vmul.f32 %v264, %v264
    %v266 = vrot.slane %v265, 4
    %v267 = vadd.f32 %v265, %v266
    %v268 = vrot.slane %v267, 2
    %v269 = vadd.f32 %v267, %v268
    %v270 = vrot.slane %v269, 1
    %v271 = vadd.f32 %v269, %v270
    %v272 = vmul.f32 %v271, %v115
    %v273 = vadd.f32 %v272, 1e-05
    %v274 = vrsqrt.pop %v273
    %v275 = vmul.f32 %v264, %v274
    %v276 = vrot.slane %v254, 4
    %v277 = vadd.f32 %v254, %v276
    %v278 = vrot.slane %v277, 2
    %v279 = vadd.f32 %v277, %v278
    %v280 = vrot.slane %v279, 1
    %v281 = vadd.f32 %v279, %v280
    %v282 = vmul.f32 %v281, %v115
    %v283 = vsub.f32 %v254, %v282
    %v284 = vmul.f32 %v283, %v283
    %v285 = vrot.slane %v284, 4
    %v286 = vadd.f32 %v284, %v285
    %v287 = vrot.slane %v286, 2
    %v288 = vadd.f32 %v286, %v287
    %v289 = vrot.slane %v288, 1
    %v290 = vadd.f32 %v288, %v289
    %v291 = vmul.f32 %v290, %v115
    %v292 = vadd.f32 %v291, 1e-05
    %v293 = vrsqrt.pop %v292
    %v294 = vmul.f32 %v283, %v293
    %v295 = vld [vmem:[%s5] sm:$0x1]
    %v297 = vlaneseq
    %v298 = vshrl.u32 %v297, 7
    %v299 = vsub.s32 0, %v298
    %v300 = vrot.slane %v295, %v299
    %v302 = vmul.f32 %v275, %v300
    %v303 = vmul.f32 %v294, %v300
    %v304 = vld [vmem:[%s6] sm:$0x1]
    %v306 = vlaneseq
    %v307 = vshrl.u32 %v306, 7
    %v308 = vsub.s32 0, %v307
    %v309 = vrot.slane %v304, %v308
    %v311 = vadd.f32 %v302, %v309
    %v312 = vadd.f32 %v303, %v309
    %v313 = vmax.f32 %v311, 0.0
    %v314 = vmax.f32 %v312, 0.0
    %v315 = vld [vmem:[#allocation7] sm:$0xff]
    %v316 = vld [vmem:[#allocation7 + $0x8] sm:$0xff]
    %v317 = vld [vmem:[#allocation7 + $0x10] sm:$0xff]
    %v318 = vld [vmem:[#allocation7 + $0x18] sm:$0xff]
    %v319 = vld [vmem:[#allocation7 + $0x20] sm:$0xff]
    %v320 = vld [vmem:[#allocation7 + $0x28] sm:$0xff]
    %v321 = vld [vmem:[#allocation7 + $0x30] sm:$0xff]
    %v322 = vld [vmem:[#allocation7 + $0x38] sm:$0xff]
    %v323 = vld [vmem:[#allocation7 + $0x40] sm:$0xff]
    %v324 = vld [vmem:[#allocation7 + $0x48] sm:$0xff]
    %v325 = vld [vmem:[#allocation7 + $0x50] sm:$0xff]
    %v326 = vld [vmem:[#allocation7 + $0x58] sm:$0xff]
    %v327 = vld [vmem:[#allocation7 + $0x60] sm:$0xff]
    %v328 = vld [vmem:[#allocation7 + $0x68] sm:$0xff]
    %v329 = vld [vmem:[#allocation7 + $0x70] sm:$0xff]
    %v330 = vld [vmem:[#allocation7 + $0x78] sm:$0xff]
    %v331 = vld [vmem:[%s8] sm:$0x1]
    %v333 = vlaneseq
    %v334 = vshrl.u32 %v333, 7
    %v335 = vsub.s32 0, %v334
    %v336 = vrot.slane %v331, %v335
    %338 = vmatprep.subr.mxu0 0.0
    %339 = vmatpush1.msra.mxu0 %v330
    %340 = vmatprep.subr.mxu0 0.0
    %341 = vmatpush1.msra.mxu0 %v329
    %342 = vmatprep.subr.mxu0 0.0
    %343 = vmatpush1.msra.mxu0 %v328
    %344 = vmatprep.subr.mxu0 0.0
    %345 = vmatpush1.msra.mxu0 %v327
    %346 = vmatprep.subr.mxu0 0.0
    %347 = vmatpush1.msra.mxu0 %v326
    %348 = vmatprep.subr.mxu0 0.0
    %349 = vmatpush1.msra.mxu0 %v325
    %350 = vmatprep.subr.mxu0 0.0
    %351 = vmatpush1.msra.mxu0 %v324
    %352 = vmatprep.subr.mxu0 0.0
    %353 = vmatpush1.msra.mxu0 %v323
    %354 = vmatprep.subr.mxu0 0.0
    %355 = vmatpush1.msra.mxu0 %v322
    %356 = vmatprep.subr.mxu0 0.0
    %357 = vmatpush1.msra.mxu0 %v321
    %358 = vmatprep.subr.mxu0 0.0
    %359 = vmatpush1.msra.mxu0 %v320
    %360 = vmatprep.subr.mxu0 0.0
    %361 = vmatpush1.msra.mxu0 %v319
    %362 = vmatprep.subr.mxu0 0.0
    %363 = vmatpush1.msra.mxu0 %v318
    %364 = vmatprep.subr.mxu0 0.0
    %365 = vmatpush1.msra.mxu0 %v317
    %366 = vmatprep.subr.mxu0 0.0
    %367 = vmatpush1.msra.mxu0 %v316
    %368 = vmatprep.subr.mxu0 0.0
    %369 = vmatpush1.msra.mxu0 %v315
    %370 = vmatprep.subr.mxu0 0.0
    %371 = vmatpush2.msra.mxu0 0.0
    %372 = vmatprep.subr.mxu0 0.0
    %373 = vmatpush2.msra.mxu0 0.0
    %374 = vmatprep.subr.mxu0 0.0
    %375 = vmatpush2.msra.mxu0 0.0
    %376 = vmatprep.subr.mxu0 0.0
    %377 = vmatpush2.msra.mxu0 0.0
    %378 = vmatprep.subr.mxu0 0.0
    %379 = vmatpush2.msra.mxu0 0.0
    %380 = vmatprep.subr.mxu0 0.0
    %381 = vmatpush2.msra.mxu0 0.0
    %382 = vmatprep.subr.mxu0 0.0
    %383 = vmatpush2.msra.mxu0 0.0
    %384 = vmatprep.subr.mxu0 0.0
    %385 = vmatpush2.msra.mxu0 0.0
    %386 = vmatprep.subr.mxu0 0.0
    %387 = vmatpush2.msra.mxu0 0.0
    %388 = vmatprep.subr.mxu0 0.0
    %389 = vmatpush2.msra.mxu0 0.0
    %390 = vmatprep.subr.mxu0 0.0
    %391 = vmatpush2.msra.mxu0 0.0
    %392 = vmatprep.subr.mxu0 0.0
    %393 = vmatpush2.msra.mxu0 0.0
    %394 = vmatprep.subr.mxu0 0.0
    %395 = vmatpush2.msra.mxu0 0.0
    %396 = vmatprep.subr.mxu0 0.0
    %397 = vmatpush2.msra.mxu0 0.0
    %398 = vmatprep.subr.mxu0 0.0
    %399 = vmatpush2.msra.mxu0 0.0
    %400 = vmatprep.subr.mxu0 0.0
    %401 = vmatpush2.msra.mxu0 0.0
    %402 = vmatprep.mubr.f32.mxu0 0.0
    %403 = vmatmul.mubr.f32.gmra.mxu0 %v313
    %v404 = vpop.f32.mrf.mxu0
    %v405 = vadd.f32 %v336, %v404
    %v406 = vpop.f32.mrf.mxu0
    %407 = vmatprep.mubr.f32.mxu0 0.0
    %408 = vmatmul.mubr.f32.gmra.mxu0 %v314
    %v409 = vpop.f32.mrf.mxu0
    %v410 = vadd.f32 %v336, %v409
    %v411 = vpop.f32.mrf.mxu0
    %412 = vdwg.mxu0
    %v413 = vmul.f32 %v405, %v108
    %v414 = vmul.f32 %v410, %v107
    %415 = vadd.xlane.f32.xlu0 %v413
    %v416 = vpop.xlane.xlu0 %415
    %417 = vadd.xlane.f32.xlu0 %v414
    %v418 = vpop.xlane.xlu0 %417
    %v419 = vmul.f32 %v405, %v405
    %v420 = vmul.f32 %v410, %v410
    %421 = vadd.xlane.f32.xlu0 %v419
    %v422 = vpop.xlane.xlu0 %421
    %423 = vadd.xlane.f32.xlu0 %v420
    %v424 = vpop.xlane.xlu0 %423
    %v425 = vmul.f32 %v108, %v108
    %v426 = vmul.f32 %v107, %v107
    %427 = vadd.xlane.f32.xlu0 %v425
    %v428 = vpop.xlane.xlu0 %427
    %429 = vadd.xlane.f32.xlu0 %v426
    %v430 = vpop.xlane.xlu0 %429
    %v431 = vmax.f32 %v422, 1e-16
    %v432 = vmax.f32 %v424, 1e-16
    %v433 = vrsqrt.pop %v431
    %v434 = vrsqrt.pop %v432
    %v435 = vmul.f32 %v416, %v433
    %v436 = vmul.f32 %v418, %v434
    %v437 = vmax.f32 %v428, 1e-16
    %v438 = vmax.f32 %v430, 1e-16
    %v439 = vrsqrt.pop %v437
    %v440 = vrsqrt.pop %v438
    %v441 = vmul.f32 %v435, %v439
    %v442 = vmul.f32 %v436, %v440
    %vm443 = vcmask 7168
    %v444 = vsel %vm443, %v441, 0.0
    %445 = vadd.xlane.f32.xlu0 %v444
    %v446 = vpop.xlane.xlu0 %445
    %v447 = vrot.slane %v446, 4
    %v448 = vadd.f32 %v446, %v447
    %v449 = vrot.slane %v448, 2
    %v450 = vadd.f32 %v448, %v449
    %v451 = vrot.slane %v450, 1
    %v452 = vadd.f32 %v450, %v451
    %s453 = vtos %v452
    %v454 = vstv %s453
    %v455 = vmul.f32 %v454, %v115
    %v456 = vsel %vm443, %v442, 0.0
    %457 = vadd.xlane.f32.xlu0 %v456
    %v458 = vpop.xlane.xlu0 %457
    %v459 = vrot.slane %v458, 4
    %v460 = vadd.f32 %v458, %v459
    %v461 = vrot.slane %v460, 2
    %v462 = vadd.f32 %v460, %v461
    %v463 = vrot.slane %v462, 1
    %v464 = vadd.f32 %v462, %v463
    %s465 = vtos %v464
    %v466 = vstv %s465
    %v467 = vmul.f32 %v466, %v115
    %v468 = vadd.f32 %v455, %v467
    %v469 = vsub.f32 0.0, %v468
    %v470 = vmul.f32 %v469, 0.5
    %471 = vst [vmem:[%s9] sm:$0xff] %v470
    // Predicated region
    $region50: #{simsiam_loss_device.1} parent=1 // pred_check
      _
    $region51: #{simsiam_loss_device.1} parent=1 // pred_check_branch
      %473 = sbr.rel (0) target = $region53
    $region52: #{simsiam_loss_device.1} parent=1 // pred_region
      _
    $region53: #{simsiam_loss_device.1} parent=1 // pred_fallthru
      _
    // Predicated region
    $region54: #{simsiam_loss_device.1} parent=1 // pred_check
      _
    $region55: #{simsiam_loss_device.1} parent=1 // pred_check_branch
      %475 = sbr.rel (0) target = $region57
    $region56: #{simsiam_loss_device.1} parent=1 // pred_region
      _
    $region57: #{simsiam_loss_device.1} parent=1 // pred_fallthru
      _
    %476 = vsyncpa [#allocation4], 1
    %477 = vsyncpa [#allocation8], 1
    %478 = vsyncpa [#allocation5], 1

</llo_original>
